<compile_context>
chip_gen: v7x
topology: tpu7x:2x2x1
jax: 0.10.0
libtpu: 0.0.40
codegen_flags: <defaults>
</compile_context>

<pallas_src>
import math

import jax
import jax.numpy as jnp
from jax.experimental import pallas as pl
from jax.experimental.pallas import tpu as pltpu


_GELU_TANH_C = math.sqrt(2.0 / math.pi)


def _gelu_tanh(x):
    # tanh approximation of GELU ('gelu_tanh' in ACT2FN).
    return 0.5 * x * (1.0 + jnp.tanh(_GELU_TANH_C * (x + 0.044715 * x * x * x)))


def _round_up(x, m):
    return (x + m - 1) // m * m


def _cdiv(a, b):
    return -(-a // b)


def _pick_hidden_tile(hidden, max_th=512):
    """Largest multiple-of-128 divisor of `hidden` <= max_th, else full hidden."""
    if hidden <= max_th or hidden % 128 != 0:
        return hidden
    th = (max_th // 128) * 128
    while th >= 128:
        if hidden % th == 0:
            return th
        th -= 128
    return hidden


def _mlp_kernel(x_ref, w1_ref, b1_ref, w2_ref, b2_ref, o_ref, acc_ref):
    # x_ref  : (TM, in_features)         bf16, resident across the hidden axis
    # w1_ref : (in_features, TH)         bf16, streamed over the hidden axis
    # b1_ref : (1, TH)                   f32
    # w2_ref : (TH, out_features)        bf16, streamed over the hidden axis
    # b2_ref : (1, out_features)         f32, grid-invariant (tiny)
    # o_ref  : (TM, out_features)        written once per row tile
    # acc_ref: (TM, out_features)        f32 VMEM accumulator
    h_idx = pl.program_id(1)

    @pl.when(h_idx == 0)
    def _():
        acc_ref[...] = jnp.zeros_like(acc_ref)

    # First matmul over the full in_features contraction for this hidden tile.
    h = jnp.dot(x_ref[...], w1_ref[...], preferred_element_type=jnp.float32)
    h = h + b1_ref[...]
    h = _gelu_tanh(h)

    # Second matmul: accumulate this hidden tile's contribution in f32.
    acc_ref[...] += jnp.dot(h.astype(w2_ref.dtype), w2_ref[...],
                            preferred_element_type=jnp.float32)

    @pl.when(h_idx == pl.num_programs(1) - 1)
    def _():
        # Single full-block (lane-dense) store per row tile.
        o_ref[...] = (acc_ref[...] + b2_ref[...]).astype(o_ref.dtype)


def pixart_alpha_text_projection(caption, w1, b1, w2, b2, *, tm=256, th=None,
                                 compute_dtype=jnp.bfloat16):
    """Fused linear_1 -> gelu_tanh -> linear_2.

    caption: (..., in_features)
    w1: (in_features, hidden)     b1: (hidden,)
    w2: (hidden, out_features)    b2: (out_features,)
    """
    in_features = caption.shape[-1]
    assert w1.shape[0] == in_features
    hidden = w1.shape[1]
    assert w2.shape[0] == hidden
    out_features = w2.shape[1]

    lead_shape = caption.shape[:-1]
    out_dtype = caption.dtype
    x = caption.reshape(-1, in_features)
    m = x.shape[0]

    # ---- row tiling: minimal padding, multiple-of-8 sublanes, >=2 tiles so
    # the "parallel" row axis keeps both v7x TensorCores busy. ----
    tm = max(8, _round_up(int(tm), 8))
    n_row_tiles = max(1, _cdiv(m, tm))
    if m > 8:
        n_row_tiles = max(n_row_tiles, 2)
    tm_eff = _round_up(_cdiv(m, n_row_tiles), 8)
    m_pad = _round_up(m, tm_eff)

    # ---- hidden tiling (streamed / "arbitrary" reduction axis). ----
    if th is None or not (0 < th <= hidden and hidden % th == 0
                          and (th == hidden or th % 128 == 0)):
        th = _pick_hidden_tile(hidden)
    n_h = hidden // th

    # bf16 MXU operands, f32 accumulation.
    x = x.astype(compute_dtype)
    if m_pad != m:
        x = jnp.pad(x, ((0, m_pad - m), (0, 0)))
    w1c = w1.astype(compute_dtype)
    w2c = w2.astype(compute_dtype)
    b1_2d = b1.reshape(1, hidden).astype(jnp.float32)
    b2_2d = b2.reshape(1, out_features).astype(jnp.float32)

    # ---- VMEM budget: double-buffered tiles + f32 accumulator, 2x margin,
    # capped at 56 MiB so the same tiling fits v7x's 64 MiB per TensorCore. ----
    cbytes = jnp.dtype(compute_dtype).itemsize
    obytes = jnp.dtype(out_dtype).itemsize
    vmem_need = (
        2 * tm_eff * in_features * cbytes          # x tiles
        + 2 * in_features * th * cbytes            # w1 hidden tiles
        + 2 * th * out_features * cbytes           # w2 hidden tiles
        + 2 * th * 4 + 2 * out_features * 4        # biases
        + 2 * tm_eff * out_features * obytes       # output tiles
        + tm_eff * out_features * 4                # f32 accumulator scratch
    )
    vmem_limit = int(min(max(2 * vmem_need + (4 << 20), 16 << 20), 56 << 20))

    cost = pl.CostEstimate(
        flops=2 * m_pad * hidden * (in_features + out_features),
        transcendentals=m_pad * hidden,
        bytes_accessed=(m_pad * in_features * cbytes
                        + in_features * hidden * cbytes
                        + hidden * out_features * cbytes
                        + hidden * 4 + out_features * 4
                        + m_pad * out_features * obytes),
    )

    grid = (m_pad // tm_eff, n_h)
    out = pl.pallas_call(
        _mlp_kernel,
        out_shape=jax.ShapeDtypeStruct((m_pad, out_features), out_dtype),
        grid=grid,
        in_specs=[
            pl.BlockSpec((tm_eff, in_features), lambda i, h: (i, 0)),
            pl.BlockSpec((in_features, th), lambda i, h: (0, h)),
            pl.BlockSpec((1, th), lambda i, h: (0, h)),
            pl.BlockSpec((th, out_features), lambda i, h: (h, 0)),
            pl.BlockSpec((1, out_features), lambda i, h: (0, 0)),
        ],
        out_specs=pl.BlockSpec((tm_eff, out_features), lambda i, h: (i, 0)),
        scratch_shapes=[pltpu.VMEM((tm_eff, out_features), jnp.float32)],
        compiler_params=pltpu.CompilerParams(
            dimension_semantics=("parallel", "arbitrary"),
            vmem_limit_bytes=vmem_limit),
        cost_estimate=cost,
    )(x, w1c, b1_2d, w2c, b2_2d)

    if m_pad != m:
        out = out[:m]
    return out.reshape(*lead_shape, out_features)


class PixArtAlphaTextProjection:
    """JAX/Pallas equivalent of the TRT-LLM PixArtAlphaTextProjection forward."""

    def __init__(self, in_features, hidden_size, out_features=None,
                 act_fn="gelu_tanh", dtype=jnp.float32, key=None):
        if out_features is None:
            out_features = hidden_size
        assert act_fn == "gelu_tanh", "only gelu_tanh is implemented"
        if key is None:
            key = jax.random.PRNGKey(0)
        k1, k2, k3, k4 = jax.random.split(key, 4)
        s1 = 1.0 / math.sqrt(in_features)
        s2 = 1.0 / math.sqrt(hidden_size)
        # Master weights stored in (in, out) orientation for the kernel matmuls;
        # they are cast to bf16 at call time for the MXU.
        self.w1 = (jax.random.normal(k1, (in_features, hidden_size)) * s1).astype(dtype)
        self.b1 = (jax.random.normal(k2, (hidden_size,)) * s1).astype(dtype)
        self.w2 = (jax.random.normal(k3, (hidden_size, out_features)) * s2).astype(dtype)
        self.b2 = (jax.random.normal(k4, (out_features,)) * s2).astype(dtype)
        self.out_features = out_features

    def __call__(self, caption, *, tm=256, th=None, compute_dtype=jnp.bfloat16):
        return pixart_alpha_text_projection(
            caption, self.w1, self.b1, self.w2, self.b2,
            tm=tm, th=th, compute_dtype=compute_dtype)


def _reference_matched(caption, w1, b1, w2, b2, compute_dtype=jnp.bfloat16):
    """Reference with the same bf16-operand / f32-accumulate precision."""
    x = caption.astype(compute_dtype)
    h = jnp.dot(x, w1.astype(compute_dtype),
                preferred_element_type=jnp.float32) + b1.astype(jnp.float32)
    h = _gelu_tanh(h)
    o = jnp.dot(h.astype(compute_dtype), w2.astype(compute_dtype),
                preferred_element_type=jnp.float32) + b2.astype(jnp.float32)
    return o.astype(caption.dtype)


def _reference_f32(caption, w1, b1, w2, b2):
    h = jnp.dot(caption, w1, precision=jax.lax.Precision.HIGHEST) + b1
    h = _gelu_tanh(h)
    return jnp.dot(h, w2, precision=jax.lax.Precision.HIGHEST) + b2


if __name__ == "__main__":
    key = jax.random.PRNGKey(0)
    k_params, k_x = jax.random.split(key, 2)

    batch, seq = 2, 8
    in_features, hidden_size, out_features = 64, 256, 128

    module = PixArtAlphaTextProjection(
        in_features, hidden_size, out_features,
        act_fn="gelu_tanh", dtype=jnp.float32, key=k_params)

    caption = jax.random.normal(k_x, (batch, seq, in_features), dtype=jnp.float32)

    # tm=8, th=128 so the tiny test still exercises both grid axes: grid=(2, 2)
    # (2 row tiles, 2 streamed hidden tiles with accumulator init/finalize).
    out = module(caption, tm=8, th=128)
    out = jax.block_until_ready(out)

    ref = _reference_matched(caption, module.w1, module.b1, module.w2, module.b2)
    ref32 = _reference_f32(caption, module.w1, module.b1, module.w2, module.b2)

    assert out.shape == (batch, seq, out_features), out.shape
    assert out.dtype == jnp.float32

    err = float(jnp.max(jnp.abs(out - ref)))
    assert jnp.allclose(out, ref, atol=1e-2, rtol=1e-2), f"max_err(matched)={err}"
    err32 = float(jnp.max(jnp.abs(out - ref32)))
    assert jnp.allclose(out, ref32, atol=8e-2, rtol=8e-2), f"max_err(f32)={err32}"

    print("KERNEL_OK")
</pallas_src>

<mosaic_0001>
module attributes {stable_mosaic.version = 11 : i64} {
  func.func @_mlp_kernel(%arg0: i32, %arg1: i32, %arg2: memref<8x64xbf16, #tpu.memory_space<vmem>>, %arg3: memref<64x128xbf16, #tpu.memory_space<vmem>>, %arg4: memref<1x128xf32, #tpu.memory_space<vmem>>, %arg5: memref<128x128xbf16, #tpu.memory_space<vmem>>, %arg6: memref<1x128xf32, #tpu.memory_space<vmem>>, %arg7: memref<8x128xf32, #tpu.memory_space<vmem>>, %arg8: memref<8x128xf32, #tpu.memory_space<vmem>>) attributes {dimension_semantics = [#tpu.dimension_semantics<parallel>, #tpu.dimension_semantics<arbitrary>], iteration_bounds = array<i64: 2, 2>, scalar_prefetch = 0 : i64, scratch_operands = 1 : i64, tpu.core_type = #tpu.core_type<tc>, window_params = [{transform_indices = @transform_0, window_bounds = array<i64: 8, 64>}, {transform_indices = @transform_1, window_bounds = array<i64: 64, 128>}, {transform_indices = @transform_2, window_bounds = array<i64: 1, 128>}, {transform_indices = @transform_3, window_bounds = array<i64: 128, 128>}, {pipeline_mode = #tpu.pipeline_mode<synchronous>, transform_indices = @transform_4, window_bounds = array<i64: 1, 128>}, {transform_indices = @transform_5, window_bounds = array<i64: 8, 128>}]} {
    %c0_i32 = arith.constant 0 : i32
    %0 = arith.cmpi eq, %arg1, %c0_i32 : i32
    %1 = arith.extui %0 : i1 to i32
    %c0_i32_0 = arith.constant 0 : i32
    %2 = arith.cmpi ne, %1, %c0_i32_0 : i32
    scf.if %2 {
      %cst_18 = arith.constant 0.000000e+00 : f32
      %31 = vector.broadcast %cst_18 : f32 to vector<8x128xf32>
      %c0_19 = arith.constant 0 : index
      %c0_20 = arith.constant 0 : index
      %32 = vector.load %arg8[%c0_19, %c0_20] : memref<8x128xf32, #tpu.memory_space<vmem>>, vector<8x128xf32>
      tpu.vector_store %arg8[%c0_19, %c0_20], %31 {strides = array<i32>} : memref<8x128xf32, #tpu.memory_space<vmem>>, vector<8x128xf32>,
    } else {
    }
    %c0 = arith.constant 0 : index
    %c0_1 = arith.constant 0 : index
    %3 = vector.load %arg2[%c0, %c0_1] : memref<8x64xbf16, #tpu.memory_space<vmem>>, vector<8x64xbf16>
    %c0_2 = arith.constant 0 : index
    %c0_3 = arith.constant 0 : index
    %4 = vector.load %arg3[%c0_2, %c0_3] : memref<64x128xbf16, #tpu.memory_space<vmem>>, vector<64x128xbf16>
    %cst = arith.constant dense<0.000000e+00> : vector<8x128xf32>
    %5 = tpu.matmul %3, %4, %cst {dimension_numbers = #tpu.dot_dimension_numbers<[1], [0], [0], [1], [0, 0, 1, 1], [], []>} : vector<8x64xbf16>, vector<64x128xbf16>, vector<8x128xf32> -> vector<8x128xf32>
    %c0_4 = arith.constant 0 : index
    %c0_5 = arith.constant 0 : index
    %6 = vector.load %arg4[%c0_4, %c0_5] : memref<1x128xf32, #tpu.memory_space<vmem>>, vector<1x128xf32>
    %7 = vector.broadcast %6 : vector<1x128xf32> to vector<8x128xf32>
    %8 = arith.addf %5, %7 : vector<8x128xf32>
    %cst_6 = arith.constant 5.000000e-01 : f32
    %9 = vector.broadcast %cst_6 : f32 to vector<8x128xf32>
    %10 = arith.mulf %9, %8 : vector<8x128xf32>
    %cst_7 = arith.constant 4.471500e-02 : f32
    %11 = vector.broadcast %cst_7 : f32 to vector<8x128xf32>
    %12 = arith.mulf %11, %8 : vector<8x128xf32>
    %13 = arith.mulf %12, %8 : vector<8x128xf32>
    %14 = arith.mulf %13, %8 : vector<8x128xf32>
    %15 = arith.addf %8, %14 : vector<8x128xf32>
    %cst_8 = arith.constant 0.797884583 : f32
    %16 = vector.broadcast %cst_8 : f32 to vector<8x128xf32>
    %17 = arith.mulf %16, %15 : vector<8x128xf32>
    %18 = math.tanh %17 : vector<8x128xf32>
    %cst_9 = arith.constant 1.000000e+00 : f32
    %19 = vector.broadcast %cst_9 : f32 to vector<8x128xf32>
    %20 = arith.addf %19, %18 : vector<8x128xf32>
    %21 = arith.mulf %10, %20 : vector<8x128xf32>
    %c0_10 = arith.constant 0 : index
    %c0_11 = arith.constant 0 : index
    %22 = vector.load %arg8[%c0_10, %c0_11] : memref<8x128xf32, #tpu.memory_space<vmem>>, vector<8x128xf32>
    %23 = arith.truncf %21 : vector<8x128xf32> to vector<8x128xbf16>
    %c0_12 = arith.constant 0 : index
    %c0_13 = arith.constant 0 : index
    %24 = vector.load %arg5[%c0_12, %c0_13] : memref<128x128xbf16, #tpu.memory_space<vmem>>, vector<128x128xbf16>
    %cst_14 = arith.constant dense<0.000000e+00> : vector<8x128xf32>
    %25 = tpu.matmul %23, %24, %cst_14 {dimension_numbers = #tpu.dot_dimension_numbers<[1], [0], [0], [1], [0, 0, 1, 1], [], []>} : vector<8x128xbf16>, vector<128x128xbf16>, vector<8x128xf32> -> vector<8x128xf32>
    %26 = arith.addf %22, %25 : vector<8x128xf32>
    %c0_15 = arith.constant 0 : index
    %c0_16 = arith.constant 0 : index
    %27 = vector.load %arg8[%c0_15, %c0_16] : memref<8x128xf32, #tpu.memory_space<vmem>>, vector<8x128xf32>
    tpu.vector_store %arg8[%c0_15, %c0_16], %26 {strides = array<i32>} : memref<8x128xf32, #tpu.memory_space<vmem>>, vector<8x128xf32>,
    %c1_i32 = arith.constant 1 : i32
    %28 = arith.cmpi eq, %arg1, %c1_i32 : i32
    %29 = arith.extui %28 : i1 to i32
    %c0_i32_17 = arith.constant 0 : i32
    %30 = arith.cmpi ne, %29, %c0_i32_17 : i32
    scf.if %30 {
      %c0_18 = arith.constant 0 : index
      %c0_19 = arith.constant 0 : index
      %31 = vector.load %arg8[%c0_18, %c0_19] : memref<8x128xf32, #tpu.memory_space<vmem>>, vector<8x128xf32>
      %c0_20 = arith.constant 0 : index
      %c0_21 = arith.constant 0 : index
      %32 = vector.load %arg6[%c0_20, %c0_21] : memref<1x128xf32, #tpu.memory_space<vmem>>, vector<1x128xf32>
      %33 = vector.broadcast %32 : vector<1x128xf32> to vector<8x128xf32>
      %34 = arith.addf %31, %33 : vector<8x128xf32>
      %c0_22 = arith.constant 0 : index
      %c0_23 = arith.constant 0 : index
      %35 = vector.load %arg7[%c0_22, %c0_23] : memref<8x128xf32, #tpu.memory_space<vmem>>, vector<8x128xf32>
      tpu.vector_store %arg7[%c0_22, %c0_23], %34 {strides = array<i32>} : memref<8x128xf32, #tpu.memory_space<vmem>>, vector<8x128xf32>,
    } else {
    }
    return
  }
  func.func @transform_0(%arg0: i32, %arg1: i32) -> (i32, i32) {
    %c0_i32 = arith.constant 0 : i32
    %c0_i32_0 = arith.constant 0 : i32
    return %arg0, %c0_i32 : i32, i32
  }
  func.func @transform_1(%arg0: i32, %arg1: i32) -> (i32, i32) {
    %c0_i32 = arith.constant 0 : i32
    %c0_i32_0 = arith.constant 0 : i32
    return %c0_i32, %arg1 : i32, i32
  }
  func.func @transform_2(%arg0: i32, %arg1: i32) -> (i32, i32) {
    %c0_i32 = arith.constant 0 : i32
    %c0_i32_0 = arith.constant 0 : i32
    return %c0_i32, %arg1 : i32, i32
  }
  func.func @transform_3(%arg0: i32, %arg1: i32) -> (i32, i32) {
    %c0_i32 = arith.constant 0 : i32
    %c0_i32_0 = arith.constant 0 : i32
    return %arg1, %c0_i32 : i32, i32
  }
  func.func @transform_4(%arg0: i32, %arg1: i32) -> (i32, i32) {
    %c0_i32 = arith.constant 0 : i32
    %c0_i32_0 = arith.constant 0 : i32
    %c0_i32_1 = arith.constant 0 : i32
    return %c0_i32, %c0_i32_0 : i32, i32
  }
  func.func @transform_5(%arg0: i32, %arg1: i32) -> (i32, i32) {
    %c0_i32 = arith.constant 0 : i32
    %c0_i32_0 = arith.constant 0 : i32
    return %arg0, %c0_i32 : i32, i32
  }
}

</mosaic_0001>

<llo_original>
// kernel: tpu_custom_call.1
$region0: #{tpu_custom_call.1}
  #allocation0 [shape = 'u32[]', space=smem, size = 0x4, offset = 0x4, fixed_abs, tag = 'smem constant byte address 0x4 - core index']
  #allocation1 [shape = 'u32[144,128]{1,0:T(1,128)}', space=vmem, size = 0x12000, scoped, tag = 'internal scratch']
  #allocation2 [shape = 'f32[8,128]{1,0:T(8,128)}', space=vmem, size = 0x1000, scoped, tag = 'scratch operand']
  %s0 = inlined_call_operand.hbm [shape: bf16[16,64], index: 0, kind: input, shape index: {}]
  %s1 = inlined_call_operand.hbm [shape: bf16[64,256], index: 1, kind: input, shape index: {}]
  %s2 = inlined_call_operand.vmem [shape: f32[1,256], index: 2, kind: input, shape index: {}]
  %s3 = inlined_call_operand.hbm [shape: bf16[256,128], index: 3, kind: input, shape index: {}]
  %s4 = inlined_call_operand.vmem [shape: f32[1,128], index: 4, kind: input, shape index: {}]
  %s5 = inlined_call_operand.hbm [shape: f32[16,128], index: 5, kind: output, shape index: {}]
  %s6 = sld [smem:[#allocation0]]
  $region73: #{tpu_custom_call.1} parent=0
    _
  %s8 = ssub.s32 1, %s6
  %s9 = scalar_select 0, %s8, %s6
  $region1: #{tpu_custom_call.1} parent=0
    #allocation3 [shape = 'u8[4096]{0}', space=vmem, size = 0x1000, scoped, tag = 'input window, operand 0']
    #allocation4 [shape = 's32[2]{0}', space=sflag, size = 0x8, scoped, tag = 'scoped memory for tpu_custom_call.1']
    #allocation5 [shape = 's32[2]{0}', space=sflag, size = 0x8, scoped, tag = 'scoped memory for tpu_custom_call.1']
    #allocation6 [shape = 'u8[32768]{0}', space=vmem, size = 0x8000, scoped, tag = 'input window, operand 1']
    #allocation7 [shape = 's32[2]{0}', space=sflag, size = 0x8, scoped, tag = 'scoped memory for tpu_custom_call.1']
    #allocation8 [shape = 'u8[65536]{0}', space=vmem, size = 0x10000, scoped, tag = 'input window, operand 3']
    #allocation9 [shape = 'u8[8192]{0}', space=vmem, size = 0x2000, scoped, tag = 'output window, operand 0']
    %10 = vsyncpa [#allocation4], 0
    %s11 = scalar_lea.sflag [#allocation4], 1
    %12 = vsyncpa %s11, 0
    %13 = vsyncpa [#allocation7], 0
    %s14 = scalar_lea.sflag [#allocation7], 1
    %15 = vsyncpa %s14, 0
    %16 = vsyncpa [#allocation5], 0
    %s17 = scalar_lea.sflag [#allocation5], 1
    %18 = vsyncpa %s17, 0
    loop: start=0, step=1, limit=6
    $region2: #{tpu_custom_call.1} parent=1 // loop_pre_header
      _
    $region3: #{tpu_custom_call.1} parent=1 // loop_header
      %s20 = sphi 0, %s24
      %p21 = scmp.ge.s32.totalorder %s20, 6
      %s27 = sphi 0, %s39
      %s28 = sphi 0, %s35
      %s29 = sphi 0, %s27
      %s30 = sphi 0, %s28
      %s31 = sphi 0, %s29
      %s32 = sphi 0, %s30
      %s42 = sphi 0, %s44
      %s45 = sphi 0, %s42
      %s46 = sphi 0, %s45
      %s62 = sphi 0, %s46
      %s68 = sphi 0, %s70
      %s71 = sphi 0, %s68
      %s72 = sphi 0, %s71
      %s88 = sphi 0, %s72
      %s94 = sphi 0, %s96
      %s97 = sphi 0, %s94
      %s98 = sphi 0, %s97
      %s114 = sphi 0, %s98
      %s120 = sphi 0, %s122
      %s123 = sphi 0, %s120
      %s124 = sphi 0, %s123
      %s140 = sphi 0, %s124
      %s144 = sphi 0, %s144
      %s146 = sphi 0, %s144
      %s147 = sphi 0, %s146
      %s161 = sphi 0, %s147
      %s167 = sphi 0, %s169
      %s170 = sphi 0, %s167
      %s171 = sphi 0, %s170
      %s187 = sphi 0, %s171
    $region4: #{tpu_custom_call.1} parent=1 // loop_header_branch
      %23 = sbr.rel (%p21) target = $region8
    $region5: #{tpu_custom_call.1} parent=1 // loop_body
      %s25 = ssub.s32 %s20, 1
      %s26 = ssub.s32 %s20, 2
      %s33 = sadd.s32 1, %s28
      %p34 = scmp.ge.s32.totalorder %s33, 2
      %s35 = scalar_select %p34, 0, %s33
      %s36 = sadd.s32 1, %s27
      %s37 = scalar_select %p34, %s36, %s27
      %p38 = scmp.ge.s32.totalorder %s37, 2
      %s39 = scalar_select %p38, 0, %s37
      %s40 = ssub.s32 %s27, %s39
      %p41 = scmp.eq.s32.totalorder %s40, 0
      %s43 = sadd.s32 %s42, 1
      %s44 = scalar_select %p41, %s42, %s43
      %p47 = pneg %p41
      %p48 = scmp.eq.s32.totalorder %s20, 3
      %p49 = por %p47, %p48
      %p50 = scmp.ne.s32.totalorder %s42, %s45
      %p51 = scmp.eq.s32.totalorder %s20, 0
      %p52 = por %p50, %p51
      %p53 = scmp.ne.s32.totalorder %s42, %s45
      %p54 = scmp.eq.s32.totalorder %s25, 3
      %p55 = por %p53, %p54
      %p56 = scmp.ne.s32.totalorder %s45, %s46
      %p57 = scmp.eq.s32.totalorder %s25, 0
      %p58 = por %p56, %p57
      %p59 = scmp.ne.s32.totalorder %s45, %s46
      %p60 = scmp.eq.s32.totalorder %s26, 3
      %p61 = por %p59, %p60
      %p63 = scmp.ne.s32.totalorder %s46, %s62
      %p64 = scmp.eq.s32.totalorder %s26, 0
      %p65 = por %p63, %p64
      %s66 = ssub.s32 %s28, %s35
      %p67 = scmp.eq.s32.totalorder %s66, 0
      %s69 = sadd.s32 %s68, 1
      %s70 = scalar_select %p67, %s68, %s69
      %p73 = pneg %p67
      %p74 = scmp.eq.s32.totalorder %s20, 3
      %p75 = por %p73, %p74
      %p76 = scmp.ne.s32.totalorder %s68, %s71
      %p77 = scmp.eq.s32.totalorder %s20, 0
      %p78 = por %p76, %p77
      %p79 = scmp.ne.s32.totalorder %s68, %s71
      %p80 = scmp.eq.s32.totalorder %s25, 3
      %p81 = por %p79, %p80
      %p82 = scmp.ne.s32.totalorder %s71, %s72
      %p83 = scmp.eq.s32.totalorder %s25, 0
      %p84 = por %p82, %p83
      %p85 = scmp.ne.s32.totalorder %s71, %s72
      %p86 = scmp.eq.s32.totalorder %s26, 3
      %p87 = por %p85, %p86
      %p89 = scmp.ne.s32.totalorder %s72, %s88
      %p90 = scmp.eq.s32.totalorder %s26, 0
      %p91 = por %p89, %p90
      %s92 = ssub.s32 %s28, %s35
      %p93 = scmp.eq.s32.totalorder %s92, 0
      %s95 = sadd.s32 %s94, 1
      %s96 = scalar_select %p93, %s94, %s95
      %p99 = pneg %p93
      %p100 = scmp.eq.s32.totalorder %s20, 3
      %p101 = por %p99, %p100
      %p102 = scmp.ne.s32.totalorder %s94, %s97
      %p103 = scmp.eq.s32.totalorder %s20, 0
      %p104 = por %p102, %p103
      %p105 = scmp.ne.s32.totalorder %s94, %s97
      %p106 = scmp.eq.s32.totalorder %s25, 3
      %p107 = por %p105, %p106
      %p108 = scmp.ne.s32.totalorder %s97, %s98
      %p109 = scmp.eq.s32.totalorder %s25, 0
      %p110 = por %p108, %p109
      %p111 = scmp.ne.s32.totalorder %s97, %s98
      %p112 = scmp.eq.s32.totalorder %s26, 3
      %p113 = por %p111, %p112
      %p115 = scmp.ne.s32.totalorder %s98, %s114
      %p116 = scmp.eq.s32.totalorder %s26, 0
      %p117 = por %p115, %p116
      %s118 = ssub.s32 %s28, %s35
      %p119 = scmp.eq.s32.totalorder %s118, 0
      %s121 = sadd.s32 %s120, 1
      %s122 = scalar_select %p119, %s120, %s121
      %p125 = pneg %p119
      %p126 = scmp.eq.s32.totalorder %s20, 3
      %p127 = por %p125, %p126
      %p128 = scmp.ne.s32.totalorder %s120, %s123
      %p129 = scmp.eq.s32.totalorder %s20, 0
      %p130 = por %p128, %p129
      %p131 = scmp.ne.s32.totalorder %s120, %s123
      %p132 = scmp.eq.s32.totalorder %s25, 3
      %p133 = por %p131, %p132
      %p134 = scmp.ne.s32.totalorder %s123, %s124
      %p135 = scmp.eq.s32.totalorder %s25, 0
      %p136 = por %p134, %p135
      %p137 = scmp.ne.s32.totalorder %s123, %s124
      %p138 = scmp.eq.s32.totalorder %s26, 3
      %p139 = por %p137, %p138
      %p141 = scmp.ne.s32.totalorder %s124, %s140
      %p142 = scmp.eq.s32.totalorder %s26, 0
      %p143 = por %p141, %p142
      %s145 = sadd.s32 %s144, 1
      %p148 = scmp.eq.s32.totalorder %s20, 3
      %p149 = scmp.ne.s32.totalorder %s144, %s146
      %p150 = scmp.eq.s32.totalorder %s20, 0
      %p151 = por %p149, %p150
      %p152 = scmp.ne.s32.totalorder %s144, %s146
      %p153 = scmp.eq.s32.totalorder %s25, 3
      %p154 = por %p152, %p153
      %p155 = scmp.ne.s32.totalorder %s146, %s147
      %p156 = scmp.eq.s32.totalorder %s25, 0
      %p157 = por %p155, %p156
      %p158 = scmp.ne.s32.totalorder %s146, %s147
      %p159 = scmp.eq.s32.totalorder %s26, 3
      %p160 = por %p158, %p159
      %p162 = scmp.ne.s32.totalorder %s147, %s161
      %p163 = scmp.eq.s32.totalorder %s26, 0
      %p164 = por %p162, %p163
      %s165 = ssub.s32 %s27, %s39
      %p166 = scmp.eq.s32.totalorder %s165, 0
      %s168 = sadd.s32 %s167, 1
      %s169 = scalar_select %p166, %s167, %s168
      %p172 = pneg %p166
      %p173 = scmp.eq.s32.totalorder %s20, 3
      %p174 = por %p172, %p173
      %p175 = scmp.ne.s32.totalorder %s167, %s170
      %p176 = scmp.eq.s32.totalorder %s20, 0
      %p177 = por %p175, %p176
      %p178 = scmp.ne.s32.totalorder %s167, %s170
      %p179 = scmp.eq.s32.totalorder %s25, 3
      %p180 = por %p178, %p179
      %p181 = scmp.ne.s32.totalorder %s170, %s171
      %p182 = scmp.eq.s32.totalorder %s25, 0
      %p183 = por %p181, %p182
      %p184 = scmp.ne.s32.totalorder %s170, %s171
      %p185 = scmp.eq.s32.totalorder %s26, 3
      %p186 = por %p184, %p185
      %p188 = scmp.ne.s32.totalorder %s171, %s187
      %p189 = scmp.eq.s32.totalorder %s26, 0
      %p190 = por %p188, %p189
      %p191 = scmp.le.s32.totalorder 1, %s20
      %p192 = scmp.lt.s32.totalorder %s20, 5
      %p193 = pnand %p191, %p192
      %p194 = pneg %p193
      // Predicated region
      $region9: #{tpu_custom_call.1} parent=5 // pred_check
        _
      $region10: #{tpu_custom_call.1} parent=5 // pred_check_branch
        %196 = sbr.rel (%p193) target = $region12
      $region11: #{tpu_custom_call.1} parent=5 // pred_region
        %s197 = ssub.s32 %s20, 1
        // Predicated region
        $region13: #{tpu_custom_call.1} parent=11 // pred_check
          %p198 = pneg %p157
        $region14: #{tpu_custom_call.1} parent=11 // pred_check_branch
          %200 = sbr.rel (%p198) target = $region16
        $region15: #{tpu_custom_call.1} parent=11 // pred_region
          _
        $region16: #{tpu_custom_call.1} parent=11 // pred_fallthru
          _
      $region12: #{tpu_custom_call.1} parent=5 // pred_fallthru
        _
      %p201 = scmp.lt.s32.totalorder %s20, 4
      // Predicated region
      $region17: #{tpu_custom_call.1} parent=5 // pred_check
        %p202 = pneg %p201
      $region18: #{tpu_custom_call.1} parent=5 // pred_check_branch
        %204 = sbr.rel (%p202) target = $region20
      $region19: #{tpu_custom_call.1} parent=5 // pred_region
        // Predicated region
        $region21: #{tpu_custom_call.1} parent=19 // pred_check
          %p205 = pneg %p52
        $region22: #{tpu_custom_call.1} parent=19 // pred_check_branch
          %207 = sbr.rel (%p205) target = $region24
        $region23: #{tpu_custom_call.1} parent=19 // pred_region
          %s208 = sand.u32 %s42, 1
          %s209 = scalar_lea.sflag [#allocation4], %s208
          %s210 = sand.u32 %s42, 1
          %s211 = smul.addr %s210, 4
          %s212 = scalar_lea.vmem [#allocation3], %s211
          %s214 = ssub.s32 64, 64
          %215 = vsyncadd %s209, %s214
          %s216 = smul.addr %s27, 64
          %s217 = scalar_lea.hbm %s0, %s216
          %s219 = sshll.u32 %s212, 4
          %s220 = int_to_ptr.vmem [resolvable:$true] %s219
          %222 = dma.hbm_to_vmem [thread:$0]  %s217, 64, %s220, %s209
        $region24: #{tpu_custom_call.1} parent=19 // pred_fallthru
          _
        // Predicated region
        $region25: #{tpu_custom_call.1} parent=19 // pred_check
          %p223 = pneg %p78
        $region26: #{tpu_custom_call.1} parent=19 // pred_check_branch
          %225 = sbr.rel (%p223) target = $region28
        $region27: #{tpu_custom_call.1} parent=19 // pred_region
          %s226 = sand.u32 %s20, 1
          %s227 = scalar_lea.sflag [#allocation7], %s226
          %s228 = sand.u32 %s68, 1
          %s229 = smul.addr %s228, 32
          %s230 = scalar_lea.vmem [#allocation6], %s229
          %s232 = ssub.s32 512, 512
          %233 = vsyncadd %s227, %s232
          %s234 = smul.addr %s28, 64
          %s235 = scalar_lea.hbm %s1, %s234
          %s236 = sshll.u32 %s230, 4
          %s237 = int_to_ptr.vmem [resolvable:$true] %s236
          %242 = dma.hbm_to_vmem [thread:$0]  %s235, 512, %s237, %s227, 128, 64, 4
        $region28: #{tpu_custom_call.1} parent=19 // pred_fallthru
          _
        // Predicated region
        $region29: #{tpu_custom_call.1} parent=19 // pred_check
          %p243 = pneg %p104
        $region30: #{tpu_custom_call.1} parent=19 // pred_check_branch
          %245 = sbr.rel (%p243) target = $region32
        $region31: #{tpu_custom_call.1} parent=19 // pred_region
          %p246 = scmp.lt.s32.totalorder %s28, 1
          %s247 = scalar_select %p246, %s28, 1
          %s248 = scalar_lea.vmem %s2, %s247
        $region32: #{tpu_custom_call.1} parent=19 // pred_fallthru
          _
        // Predicated region
        $region33: #{tpu_custom_call.1} parent=19 // pred_check
          %p249 = pneg %p130
        $region34: #{tpu_custom_call.1} parent=19 // pred_check_branch
          %251 = sbr.rel (%p249) target = $region36
        $region35: #{tpu_custom_call.1} parent=19 // pred_region
          %s252 = sand.u32 %s20, 1
          %s253 = scalar_lea.sflag [#allocation7], %s252
          %s254 = sand.u32 %s120, 1
          %s255 = smul.addr %s254, 64
          %s256 = scalar_lea.vmem [#allocation8], %s255
          %s257 = smul.u32 16, %s28
          %s259 = ssub.s32 1024, 1024
          %260 = vsyncadd %s253, %s259
          %s261 = smul.addr %s257, 64
          %s262 = scalar_lea.hbm %s3, %s261
          %s263 = sshll.u32 %s256, 4
          %s264 = int_to_ptr.vmem [resolvable:$true] %s263
          %269 = dma.hbm_to_vmem [thread:$0]  %s262, 1024, %s264, %s253, 64, 64, 4
        $region36: #{tpu_custom_call.1} parent=19 // pred_fallthru
          _
      $region20: #{tpu_custom_call.1} parent=5 // pred_fallthru
        _
      %p270 = scmp.le.s32.totalorder 1, %s20
      %p271 = scmp.lt.s32.totalorder %s20, 5
      %p272 = pnand %p270, %p271
      %p273 = pneg %p272
      // Predicated region
      $region37: #{tpu_custom_call.1} parent=5 // pred_check
        _
      $region38: #{tpu_custom_call.1} parent=5 // pred_check_branch
        %275 = sbr.rel (%p272) target = $region40
      $region39: #{tpu_custom_call.1} parent=5 // pred_region
        %s276 = ssub.s32 %s20, 1
        %s277 = sand.u32 %s45, 1
        %s278 = scalar_lea.sflag [#allocation4], %s277
        %s279 = sand.u32 %s45, 1
        %s280 = smul.addr %s279, 4
        %s281 = scalar_lea.vmem [#allocation3], %s280
        // Predicated region
        $region41: #{tpu_custom_call.1} parent=39 // pred_check
          %p282 = pneg %p58
        $region42: #{tpu_custom_call.1} parent=39 // pred_check_branch
          %284 = sbr.rel (%p282) target = $region44
        $region43: #{tpu_custom_call.1} parent=39 // pred_region
          %285 = dma.done %s278, 64
        $region44: #{tpu_custom_call.1} parent=39 // pred_fallthru
          _
        %s286 = sand.u32 %s25, 1
        %s287 = scalar_lea.sflag [#allocation7], %s286
        %s288 = sand.u32 %s71, 1
        %s289 = smul.addr %s288, 32
        %s290 = scalar_lea.vmem [#allocation6], %s289
        // Predicated region
        $region45: #{tpu_custom_call.1} parent=39 // pred_check
          %p291 = pneg %p84
        $region46: #{tpu_custom_call.1} parent=39 // pred_check_branch
          %293 = sbr.rel (%p291) target = $region48
        $region47: #{tpu_custom_call.1} parent=39 // pred_region
          %294 = dma.done %s287, 512
        $region48: #{tpu_custom_call.1} parent=39 // pred_fallthru
          _
        %s295 = sand.u32 %s25, 1
        %s296 = scalar_lea.sflag [#allocation7], %s295
        %s297 = sand.u32 %s123, 1
        %s298 = smul.addr %s297, 64
        %s299 = scalar_lea.vmem [#allocation8], %s298
        // Predicated region
        $region49: #{tpu_custom_call.1} parent=39 // pred_check
          %p300 = pneg %p136
        $region50: #{tpu_custom_call.1} parent=39 // pred_check_branch
          %302 = sbr.rel (%p300) target = $region52
        $region51: #{tpu_custom_call.1} parent=39 // pred_region
          %303 = dma.done %s296, 1024
        $region52: #{tpu_custom_call.1} parent=39 // pred_fallthru
          _
        %s304 = sand.u32 %s45, 1
        %s305 = scalar_lea.sflag [#allocation4], %s304
        %s306 = sand.u32 %s45, 1
        %s307 = smul.addr %s306, 4
        %s308 = scalar_lea.vmem [#allocation3], %s307
        %p309 = pneg %p58
        %p310 = pneg %p55
        %s311 = sand.u32 %s25, 1
        %s312 = scalar_lea.sflag [#allocation7], %s311
        %s313 = sand.u32 %s71, 1
        %s314 = smul.addr %s313, 32
        %s315 = scalar_lea.vmem [#allocation6], %s314
        %p316 = pneg %p84
        %p317 = pneg %p81
        %p318 = scmp.lt.s32.totalorder %s30, 1
        %s319 = scalar_select %p318, %s30, 1
        %s320 = scalar_lea.vmem %s2, %s319
        %p321 = pneg %p110
        %p322 = pneg %p107
        %s323 = sand.u32 %s25, 1
        %s324 = scalar_lea.sflag [#allocation7], %s323
        %s325 = sand.u32 %s123, 1
        %s326 = smul.addr %s325, 64
        %s327 = scalar_lea.vmem [#allocation8], %s326
        %p328 = pneg %p136
        %p329 = pneg %p133
        %p330 = pneg %p157
        %p331 = pneg %p154
        %p332 = pneg %p183
        %p333 = pneg %p180
        %s334 = sand.u32 %s170, 1
        %s335 = scalar_lea.sflag [#allocation5], %s334
        %s336 = sand.u32 %s170, 1
        %s337 = smul.addr %s336, 8
        %s338 = scalar_lea.vmem [#allocation9], %s337
        %p339 = scmp.lt.s32.totalorder %s30, 1
        %s340 = scalar_select %p339, %s30, 1
        %s341 = scalar_lea.vmem %s2, %s340
        %s342 = smul.u32 16, %s30
        %p344 = scmp.eq.s32.totalorder %s30, 0
        // Predicated region
        $region53: #{tpu_custom_call.1} parent=39 // pred_check
          %p345 = pneg %p344
        $region54: #{tpu_custom_call.1} parent=39 // pred_check_branch
          %347 = sbr.rel (%p345) target = $region56
        $region55: #{tpu_custom_call.1} parent=39 // pred_region
          %348 = vst [vmem:[#allocation2] sm:$0xff] 0.0
        $region56: #{tpu_custom_call.1} parent=39 // pred_fallthru
          _
        %v349 = vld [vmem:[%s281] sm:$0xf]
        %v350 = vld [vmem:[%s290] sm:$0xf]
        %v351 = vld [vmem:[%s290 + $0x4] sm:$0xf]
        %v352 = vld [vmem:[%s290 + $0x8] sm:$0xf]
        %v353 = vld [vmem:[%s290 + $0xc] sm:$0xf]
        %v354 = vld [vmem:[%s290 + $0x10] sm:$0xf]
        %v355 = vld [vmem:[%s290 + $0x14] sm:$0xf]
        %v356 = vld [vmem:[%s290 + $0x18] sm:$0xf]
        %v357 = vld [vmem:[%s290 + $0x1c] sm:$0xf]
        %v358 = vld [vmem:[%s341] sm:$0x1]
        %v360 = vlaneseq
        %v361 = vshrl.u32 %v360, 7
        %v362 = vsub.s32 0, %v361
        %v363 = vrot.slane %v358, %v362
        %v373 = vunpack.c.l.b16 %v350
        %v374 = vunpack.c.l.b16 %v351
        %v375 = vunpack.c.l.b16 %v352
        %v376 = vunpack.c.l.b16 %v353
        %v377 = vunpack.c.l.b16 %v354
        %v378 = vunpack.c.l.b16 %v355
        %v379 = vunpack.c.l.b16 %v356
        %v380 = vunpack.c.l.b16 %v357
        %v381 = vpack.c.b16 %v374, %v373
        %v382 = vpack.c.b16 %v376, %v375
        %v383 = vpack.c.b16 %v378, %v377
        %v384 = vpack.c.b16 %v380, %v379
        %vm389 = vcmask 523264
        %v391 = vsel %vm389, %v349, 0
        %393 = vmatprep.subr.bf16.mxu0 0
        %394 = vmatpush1.bf16.msra.mxu0 %v381
        %395 = vmatprep.subr.bf16.mxu0 0
        %396 = vmatpush1.bf16.msra.mxu0 %v382
        %397 = vmatprep.subr.bf16.mxu0 0
        %398 = vmatpush1.bf16.msra.mxu0 %v383
        %399 = vmatprep.subr.bf16.mxu0 0
        %400 = vmatpush1.bf16.msra.mxu0 %v384
        %401 = vmatprep.subr.bf16.mxu0 0
        %402 = vmatpush1.bf16.msra.mxu0 0
        %403 = vmatprep.subr.bf16.mxu0 0
        %404 = vmatpush1.bf16.msra.mxu0 0
        %405 = vmatprep.subr.bf16.mxu0 0
        %406 = vmatpush1.bf16.msra.mxu0 0
        %407 = vmatprep.subr.bf16.mxu0 0
        %408 = vmatpush1.bf16.msra.mxu0 0
        %409 = vmatprep.subr.bf16.mxu0 0
        %410 = vmatpush1.bf16.msra.mxu0 0
        %411 = vmatprep.subr.bf16.mxu0 0
        %412 = vmatpush1.bf16.msra.mxu0 0
        %413 = vmatprep.subr.bf16.mxu0 0
        %414 = vmatpush1.bf16.msra.mxu0 0
        %415 = vmatprep.subr.bf16.mxu0 0
        %416 = vmatpush1.bf16.msra.mxu0 0
        %417 = vmatprep.subr.bf16.mxu0 0
        %418 = vmatpush1.bf16.msra.mxu0 0
        %419 = vmatprep.subr.bf16.mxu0 0
        %420 = vmatpush1.bf16.msra.mxu0 0
        %421 = vmatprep.subr.bf16.mxu0 0
        %422 = vmatpush1.bf16.msra.mxu0 0
        %423 = vmatprep.subr.bf16.mxu0 0
        %424 = vmatpush1.bf16.msra.mxu0 0
        %425 = vmatprep.mubr.bf16.mxu0 0
        %426 = vmatmul.mubr.bf16.gmra.mrb[0].mxu0 %v391
        %v427 = vpop.f32.mrb[0].mxu0
        %v428 = vadd.f32 %v363, %v427
        %v429 = vpop.f32.mrb[0].mxu0
        %v430 = vpop.f32.mrb[0].mxu0
        %v431 = vpop.f32.mrb[0].mxu0
        %432 = vdwg.mxu0
        %v433 = vmul.f32 %v428, 0.5
        %v434 = vmul.f32 %v428, 0.044715
        %v435 = vmul.f32 %v434, %v428
        %v436 = vmul.f32 %v435, %v428
        %v437 = vadd.f32 %v428, %v436
        %v438 = vmul.f32 %v437, 0.7978846
        %v439 = vtanh.pop %v438
        %v440 = vadd.f32 %v439, 1.0
        %v441 = vmul.f32 %v433, %v440
        %v442 = vld [vmem:[#allocation2] sm:$0xff]
        %v443 = vpack.c.bf16 %v441, %v441
        %v444 = vld [vmem:[%s299] sm:$0xf]
        %v445 = vld [vmem:[%s299 + $0x4] sm:$0xf]
        %v446 = vld [vmem:[%s299 + $0x8] sm:$0xf]
        %v447 = vld [vmem:[%s299 + $0xc] sm:$0xf]
        %v448 = vld [vmem:[%s299 + $0x10] sm:$0xf]
        %v449 = vld [vmem:[%s299 + $0x14] sm:$0xf]
        %v450 = vld [vmem:[%s299 + $0x18] sm:$0xf]
        %v451 = vld [vmem:[%s299 + $0x1c] sm:$0xf]
        %v452 = vld [vmem:[%s299 + $0x20] sm:$0xf]
        %v453 = vld [vmem:[%s299 + $0x24] sm:$0xf]
        %v454 = vld [vmem:[%s299 + $0x28] sm:$0xf]
        %v455 = vld [vmem:[%s299 + $0x2c] sm:$0xf]
        %v456 = vld [vmem:[%s299 + $0x30] sm:$0xf]
        %v457 = vld [vmem:[%s299 + $0x34] sm:$0xf]
        %v458 = vld [vmem:[%s299 + $0x38] sm:$0xf]
        %v459 = vld [vmem:[%s299 + $0x3c] sm:$0xf]
        %v476 = vunpack.c.l.b16 %v444
        %v477 = vunpack.c.l.b16 %v445
        %v478 = vunpack.c.l.b16 %v446
        %v479 = vunpack.c.l.b16 %v447
        %v480 = vunpack.c.l.b16 %v448
        %v481 = vunpack.c.l.b16 %v449
        %v482 = vunpack.c.l.b16 %v450
        %v483 = vunpack.c.l.b16 %v451
        %v484 = vunpack.c.l.b16 %v452
        %v485 = vunpack.c.l.b16 %v453
        %v486 = vunpack.c.l.b16 %v454
        %v487 = vunpack.c.l.b16 %v455
        %v488 = vunpack.c.l.b16 %v456
        %v489 = vunpack.c.l.b16 %v457
        %v490 = vunpack.c.l.b16 %v458
        %v491 = vunpack.c.l.b16 %v459
        %v492 = vpack.c.b16 %v477, %v476
        %v493 = vpack.c.b16 %v479, %v478
        %v494 = vpack.c.b16 %v481, %v480
        %v495 = vpack.c.b16 %v483, %v482
        %v496 = vpack.c.b16 %v485, %v484
        %v497 = vpack.c.b16 %v487, %v486
        %v498 = vpack.c.b16 %v489, %v488
        %v499 = vpack.c.b16 %v491, %v490
        %508 = vmatprep.subr.bf16.mxu0 0
        %509 = vmatpush1.bf16.msra.mxu0 %v492
        %510 = vmatprep.subr.bf16.mxu0 0
        %511 = vmatpush1.bf16.msra.mxu0 %v493
        %512 = vmatprep.subr.bf16.mxu0 0
        %513 = vmatpush1.bf16.msra.mxu0 %v494
        %514 = vmatprep.subr.bf16.mxu0 0
        %515 = vmatpush1.bf16.msra.mxu0 %v495
        %516 = vmatprep.subr.bf16.mxu0 0
        %517 = vmatpush1.bf16.msra.mxu0 %v496
        %518 = vmatprep.subr.bf16.mxu0 0
        %519 = vmatpush1.bf16.msra.mxu0 %v497
        %520 = vmatprep.subr.bf16.mxu0 0
        %521 = vmatpush1.bf16.msra.mxu0 %v498
        %522 = vmatprep.subr.bf16.mxu0 0
        %523 = vmatpush1.bf16.msra.mxu0 %v499
        %524 = vmatprep.subr.bf16.mxu0 0
        %525 = vmatpush1.bf16.msra.mxu0 0
        %526 = vmatprep.subr.bf16.mxu0 0
        %527 = vmatpush1.bf16.msra.mxu0 0
        %528 = vmatprep.subr.bf16.mxu0 0
        %529 = vmatpush1.bf16.msra.mxu0 0
        %530 = vmatprep.subr.bf16.mxu0 0
        %531 = vmatpush1.bf16.msra.mxu0 0
        %532 = vmatprep.subr.bf16.mxu0 0
        %533 = vmatpush1.bf16.msra.mxu0 0
        %534 = vmatprep.subr.bf16.mxu0 0
        %535 = vmatpush1.bf16.msra.mxu0 0
        %536 = vmatprep.subr.bf16.mxu0 0
        %537 = vmatpush1.bf16.msra.mxu0 0
        %538 = vmatprep.subr.bf16.mxu0 0
        %539 = vmatpush1.bf16.msra.mxu0 0
        %540 = vmatprep.mubr.bf16.mxu0 0
        %541 = vmatmul.mubr.bf16.gmra.mrb[0].mxu0 %v443
        %v542 = vpop.f32.mrb[0].mxu0
        %v543 = vadd.f32 0.0, %v542
        %v544 = vpop.f32.mrb[0].mxu0
        %v545 = vpop.f32.mrb[0].mxu0
        %v546 = vpop.f32.mrb[0].mxu0
        %547 = vdwg.mxu0
        %v548 = vadd.f32 %v442, %v543
        %549 = vst [vmem:[#allocation2] sm:$0xff] %v548
        %p550 = scmp.eq.s32.totalorder %s30, 1
        // Predicated region
        $region57: #{tpu_custom_call.1} parent=39 // pred_check
          %p551 = pneg %p550
        $region58: #{tpu_custom_call.1} parent=39 // pred_check_branch
          %553 = sbr.rel (%p551) target = $region60
        $region59: #{tpu_custom_call.1} parent=39 // pred_region
          %v554 = vld [vmem:[#allocation2] sm:$0xff]
          %v555 = vld [vmem:[%s4] sm:$0x1]
          %v557 = vlaneseq
          %v558 = vshrl.u32 %v557, 7
          %v559 = vsub.s32 0, %v558
          %v560 = vrot.slane %v555, %v559
          %v562 = vadd.f32 %v554, %v560
          %563 = vst [vmem:[%s338] sm:$0xff] %v562
        $region60: #{tpu_custom_call.1} parent=39 // pred_fallthru
          _
        %s564 = sand.u32 %s170, 1
        %s565 = scalar_lea.sflag [#allocation5], %s564
        %s566 = sand.u32 %s170, 1
        %s567 = smul.addr %s566, 8
        %s568 = scalar_lea.vmem [#allocation9], %s567
        // Predicated region
        $region61: #{tpu_custom_call.1} parent=39 // pred_check
          %p569 = pneg %p180
        $region62: #{tpu_custom_call.1} parent=39 // pred_check_branch
          %571 = sbr.rel (%p569) target = $region64
        $region63: #{tpu_custom_call.1} parent=39 // pred_region
          %s573 = ssub.s32 128, 128
          %574 = vsyncadd %s565, %s573
          %s575 = smul.addr %s29, 128
          %s576 = scalar_lea.hbm %s5, %s575
          %s578 = sshll.u32 %s568, 4
          %s579 = int_to_ptr.vmem [resolvable:$true] %s578
          %581 = dma.vmem_to_hbm [thread:$0]  %s579, 128, %s576, %s565
        $region64: #{tpu_custom_call.1} parent=39 // pred_fallthru
          _
      $region40: #{tpu_custom_call.1} parent=5 // pred_fallthru
        _
      %p582 = scmp.le.s32.totalorder 2, %s20
      // Predicated region
      $region65: #{tpu_custom_call.1} parent=5 // pred_check
        %p583 = pneg %p582
      $region66: #{tpu_custom_call.1} parent=5 // pred_check_branch
        %585 = sbr.rel (%p583) target = $region68
      $region67: #{tpu_custom_call.1} parent=5 // pred_region
        %s586 = ssub.s32 %s20, 2
        // Predicated region
        $region69: #{tpu_custom_call.1} parent=67 // pred_check
          %p587 = pneg %p186
        $region70: #{tpu_custom_call.1} parent=67 // pred_check_branch
          %589 = sbr.rel (%p587) target = $region72
        $region71: #{tpu_custom_call.1} parent=67 // pred_region
          %s590 = sand.u32 %s171, 1
          %s591 = scalar_lea.sflag [#allocation5], %s590
          %s592 = sand.u32 %s171, 1
          %s593 = smul.addr %s592, 8
          %s594 = scalar_lea.vmem [#allocation9], %s593
          %595 = dma.done %s591, 128
        $region72: #{tpu_custom_call.1} parent=67 // pred_fallthru
          _
      $region68: #{tpu_custom_call.1} parent=5 // pred_fallthru
        _
    $region6: #{tpu_custom_call.1} parent=1 // loop_footer
      %s24 = sadd.s32 1, %s20
    $region7: #{tpu_custom_call.1} parent=1 // loop_footer_branch
      %19 = sbr.rel target = $region3
    $region8: #{tpu_custom_call.1} parent=1 // loop_exit
      _
    %596 = vsyncpa [#allocation4], 1
    %s597 = scalar_lea.sflag [#allocation4], 1
    %598 = vsyncpa %s597, 1
    %599 = vsyncpa [#allocation7], 1
    %s600 = scalar_lea.sflag [#allocation7], 1
    %601 = vsyncpa %s600, 1
    %602 = vsyncpa [#allocation5], 1
    %s603 = scalar_lea.sflag [#allocation5], 1
    %604 = vsyncpa %s603, 1

</llo_original>
